<compile_context>
chip_gen: v5e
topology: v5e:2x2
jax: 0.10.0
libtpu: 0.0.40
codegen_flags: <defaults>
</compile_context>

<pallas_src>
import functools

import jax
import jax.numpy as jnp
from jax.experimental import pallas as pl
from jax.experimental.pallas import tpu as pltpu


# -----------------------------------------------------------------------------
# VMEM budgeting (generation-aware: 64 MiB/TC on v7x, 128 MiB on v5e/v6e).
# -----------------------------------------------------------------------------
@functools.lru_cache(maxsize=None)
def _physical_vmem_bytes():
    try:
        info = pltpu.get_tpu_info()
        for attr in ("vmem_capacity_bytes", "vmem_bytes", "vmem_size_bytes"):
            v = getattr(info, attr, None)
            if v:
                return int(v)
    except Exception:
        pass
    return 64 << 20          # conservative default (v7x per-TensorCore VMEM)


def _vmem_limit_cap():
    # Leave ~8 MiB headroom for Mosaic-internal scratch/semaphores; never ask
    # for more than ~100 MiB even on 128 MiB parts.
    return min(_physical_vmem_bytes() - (8 << 20), 100 << 20)


def _block_budget():
    # Budget available to one kernel's double-buffered user blocks.
    return int(_vmem_limit_cap() * 0.85)


def _vmem_limit(*block_bytes):
    """Scoped-VMEM request: 2x (double buffering) + 50% margin, clamped."""
    need = 2 * sum(int(x) for x in block_bytes)
    need = int(need * 1.5) + (1 << 20)
    return max(16 << 20, min(need, _vmem_limit_cap()))


def _divisor_tiles(n):
    """Divisors of n, descending."""
    return [t for t in range(n, 0, -1) if n % t == 0]


def _pick_h_tile(h, per_row_bytes, budget):
    """Largest H tile (divisor of h, multiple of 8 or == h) whose
    double-buffered footprint 2 * t * per_row_bytes fits the budget."""
    valid = [t for t in _divisor_tiles(h) if t % 8 == 0 or t == h]
    for t in valid:
        if 2 * t * per_row_bytes <= budget:
            return t
    return valid[-1]     # smallest valid tile; scoped limit is clamped anyway


def _pick_volume_tiles(c, d, h, w, budget):
    """(d_tile, h_tile) for the depthmap->volume kernel."""
    def foot(d_tile, th):
        # img (c,th,w) + depthmap (th,w) + out (c,d_tile,th,w), double buffered
        return 2 * 4 * th * w * (c + 1 + c * d_tile)
    for d_tile in [t for t in _divisor_tiles(min(d, 8)) if d % t == 0]:
        if foot(d_tile, h) <= budget:
            return d_tile, h
    th = _pick_h_tile(h, 4 * w * (2 * c + 1), budget)
    return 1, th


# -----------------------------------------------------------------------------
# Kernel 1: PSF normalization.  View the PSF as (C*D, H, W); each grid step
# normalizes k slices by their per-slice sums.
# -----------------------------------------------------------------------------
def _psf_normalize_kernel(psf_ref, out_ref):
    p = psf_ref[...]                               # (k, H, W)
    s = jnp.sum(p, axis=-1, keepdims=True)         # (k, H, 1)  lane reduce
    s = jnp.sum(s, axis=-2, keepdims=True)         # (k, 1, 1)  sublane reduce
    # exact reciprocal (approx=True would be EUP-cheaper but costs ~2^-12 rel err)
    out_ref[...] = p * pl.reciprocal(s, approx=False)


def normalize_psf_pallas(psf):
    # psf: (1, C, D, H, W)
    _, c, d, h, w = psf.shape
    n = c * d
    flat = psf.reshape(n, h, w)
    budget = _block_budget()
    slice_bytes = h * w * 4
    k = 1
    for t in _divisor_tiles(n):
        if 2 * 2 * t * slice_bytes <= budget:      # in + out, double buffered
            k = t
            break
    blk = k * slice_bytes
    out = pl.pallas_call(
        _psf_normalize_kernel,
        out_shape=jax.ShapeDtypeStruct(flat.shape, flat.dtype),
        grid=(n // k,),
        in_specs=[pl.BlockSpec((k, h, w), lambda i: (i, 0, 0))],
        out_specs=pl.BlockSpec((k, h, w), lambda i: (i, 0, 0)),
        compiler_params=pltpu.CompilerParams(
            dimension_semantics=("parallel",),
            vmem_limit_bytes=_vmem_limit(blk, blk)),
    )(flat)
    return out.reshape(psf.shape)


# -----------------------------------------------------------------------------
# Kernel 2: depthmap -> layered-depth volume.  Grid = (B, H-tiles, D-tiles)
# with the depth-tile axis innermost so img/depthmap blocks (indexed only by
# (b, h-tile)) are not re-DMA'd across it.  Each step writes d_tile depth
# slabs; depth-bin values come from program_id, so no (D,H,W) iota and no
# per-slab max output (the scale round trip was removed entirely).
# -----------------------------------------------------------------------------
def _volume_kernel(img_ref, depth_ref, vol_ref, *, n_depths, d_tile):
    dm = jnp.clip(depth_ref[...], 1e-8, 1.0) * n_depths        # (tH, W)
    img = img_ref[...]                                          # (C, tH, W)
    d0 = (pl.program_id(2) * d_tile).astype(jnp.float32)
    for dd in range(d_tile):                                    # small static unroll
        diff = (d0 + jnp.float32(dd + 1)) - dm
        ld = jnp.where(jnp.logical_and(diff >= 0.0, diff < 1.0), 1.0, 0.0)
        vol_ref[:, dd, :, :] = (ld[None, :, :] * img).astype(vol_ref.dtype)


def build_volume_pallas(img, depthmap, n_depths):
    # img: (B, C, H, W); depthmap: (B, H, W)
    b, c, h, w = img.shape
    d = n_depths
    d_tile, th = _pick_volume_tiles(c, d, h, w, _block_budget())
    n_h = h // th
    n_d = d // d_tile
    kernel = functools.partial(_volume_kernel, n_depths=d, d_tile=d_tile)
    img_b = c * th * w * 4
    dep_b = th * w * 4
    vol_b = c * d_tile * th * w * 4
    volume = pl.pallas_call(
        kernel,
        out_shape=jax.ShapeDtypeStruct((b, c, d, h, w), img.dtype),
        grid=(b, n_h, n_d),
        in_specs=[
            pl.BlockSpec((None, c, th, w), lambda i, jh, jd: (i, 0, jh, 0)),
            pl.BlockSpec((None, th, w), lambda i, jh, jd: (i, jh, 0)),
        ],
        out_specs=pl.BlockSpec((None, c, d_tile, th, w),
                               lambda i, jh, jd: (i, 0, jd, jh, 0)),
        compiler_params=pltpu.CompilerParams(
            dimension_semantics=("parallel", "parallel", "parallel"),
            vmem_limit_bytes=_vmem_limit(img_b, dep_b, vol_b)),
    )(img, depthmap)
    return volume


# -----------------------------------------------------------------------------
# Kernel 3: (Fvolume * Fpsf).sum(depth).  Complex numbers carried as separate
# real/imag planes.  Grid = (C, H-tiles, B), all axes "parallel" (every grid
# point writes a distinct output tile); B innermost so the PSF blocks (index
# depends only on C and the H-tile) are fetched once per (c, h-tile).  The
# H-tile is chosen from the actual VMEM footprint (D- and Wf-aware).
# -----------------------------------------------------------------------------
def _freq_mul_sum_kernel(vr_ref, vi_ref, pr_ref, pi_ref, or_ref, oi_ref):
    vr = vr_ref[...]   # (D, tH, Wf)
    vi = vi_ref[...]
    pr = pr_ref[...]
    pi = pi_ref[...]
    or_ref[...] = jnp.sum(vr * pr - vi * pi, axis=0)
    oi_ref[...] = jnp.sum(vr * pi + vi * pr, axis=0)


def freq_mul_sum_pallas(vol_re, vol_im, psf_re, psf_im):
    # vol_*: (B, C, D, H, Wf); psf_*: (C, D, H, Wf)
    b, c, d, h, wf = vol_re.shape
    per_row = (4 * d * wf + 2 * wf) * 4          # bytes per H row of all blocks
    th = _pick_h_tile(h, per_row, _block_budget())
    n_h = h // th
    vol_blk = d * th * wf * 4
    out_blk = th * wf * 4
    # NOTE: padding Wf=W//2+1 up to a multiple of 128 would give lane-dense
    # (unmasked) stores, but it inflates the DMA bytes of a DMA-bound kernel
    # by up to ~50%, so it is intentionally not done.
    out_re, out_im = pl.pallas_call(
        _freq_mul_sum_kernel,
        out_shape=(
            jax.ShapeDtypeStruct((b, c, h, wf), vol_re.dtype),
            jax.ShapeDtypeStruct((b, c, h, wf), vol_re.dtype),
        ),
        grid=(c, n_h, b),
        in_specs=[
            pl.BlockSpec((None, None, d, th, wf),
                         lambda ci, hi, bi: (bi, ci, 0, hi, 0)),
            pl.BlockSpec((None, None, d, th, wf),
                         lambda ci, hi, bi: (bi, ci, 0, hi, 0)),
            pl.BlockSpec((None, d, th, wf),
                         lambda ci, hi, bi: (ci, 0, hi, 0)),
            pl.BlockSpec((None, d, th, wf),
                         lambda ci, hi, bi: (ci, 0, hi, 0)),
        ],
        out_specs=(
            pl.BlockSpec((None, None, th, wf),
                         lambda ci, hi, bi: (bi, ci, hi, 0)),
            pl.BlockSpec((None, None, th, wf),
                         lambda ci, hi, bi: (bi, ci, hi, 0)),
        ),
        compiler_params=pltpu.CompilerParams(
            dimension_semantics=("parallel", "parallel", "parallel"),
            vmem_limit_bytes=_vmem_limit(vol_blk, vol_blk, vol_blk, vol_blk,
                                         out_blk, out_blk)),
    )(vol_re, vol_im, psf_re, psf_im)
    return out_re, out_im


# -----------------------------------------------------------------------------
# Camera module (forward-path only).  The abstract build_camera /
# _psf_at_camera_impl are replaced by a deterministic synthetic Gaussian PSF
# with the correct (n_wl, n_depths, H, W) shape.
# -----------------------------------------------------------------------------
class PallasCamera:
    def __init__(self, focal_depth, min_depth, max_depth, n_depths, image_size,
                 mask_size, focal_length, mask_diameter, camera_pixel_pitch,
                 wavelengths, diffraction_efficiency=0.7):
        assert min_depth > 1e-6
        if isinstance(image_size, int):
            image_size = [image_size, image_size]
        assert image_size[0] % 2 == 0 and image_size[1] % 2 == 0
        if isinstance(wavelengths, float):
            wavelengths = [wavelengths]
        assert len(wavelengths) % 3 == 0

        self.n_depths = n_depths
        self.min_depth = min_depth
        self.max_depth = max_depth
        self.focal_depth = focal_depth
        self.focal_length = focal_length
        self.mask_diameter = mask_diameter
        self.mask_pitch = mask_diameter / mask_size
        self.camera_pixel_pitch = camera_pixel_pitch
        self.mask_size = mask_size
        self.image_size = image_size
        self.wavelengths = jnp.asarray(wavelengths, dtype=jnp.float32)
        self.n_wl = len(wavelengths)
        self.diffraction_efficiency = diffraction_efficiency

        # scene_distances = ips_to_metric(linspace(0,1,n_depths), min, max)
        ips = jnp.linspace(0.0, 1.0, n_depths)
        self.scene_distances = 1.0 / (ips * (1.0 / max_depth - 1.0 / min_depth)
                                      + 1.0 / min_depth)

        # Deterministic synthetic PSF standing in for the abstract
        # build_camera() / _psf_at_camera_impl(): depth- and wavelength-
        # dependent Gaussian blur kernels.
        h, w = self.image_size
        y = jnp.arange(h, dtype=jnp.float32) - (h - 1) / 2.0
        x = jnp.arange(w, dtype=jnp.float32) - (w - 1) / 2.0
        r2 = y[:, None] ** 2 + x[None, :] ** 2                     # (H, W)
        sigma = (1.0
                 + 0.6 * jnp.arange(n_depths, dtype=jnp.float32)[None, :, None, None]
                 + 0.3 * jnp.arange(self.n_wl, dtype=jnp.float32)[:, None, None, None])
        self._base_psf = jnp.exp(-r2[None, None] / (2.0 * sigma ** 2)).astype(jnp.float32)

    def sensor_distance(self):
        return 1.0 / (1.0 / self.focal_length - 1.0 / self.focal_depth)

    def psf_at_camera(self, size=None):
        psf = self._base_psf                                        # (n_wl, D, H, W)
        if size is not None:
            pad_h = (size[0] - self.image_size[0]) // 2
            pad_w = (size[1] - self.image_size[1]) // 2
            psf = jnp.pad(psf, ((0, 0), (0, 0), (pad_h, pad_h), (pad_w, pad_w)))
        return jnp.fft.fftshift(psf, axes=(-1, -2))

    def normalize_psf(self, psfimg):
        return normalize_psf_pallas(psfimg)

    def _capture_impl(self, volume, psf, occlusion, eps=1e-3):
        del eps
        if occlusion:
            # TODO(synk): occlusion compositing path (flip-cumsum over depth +
            # over_op + three extra FFT convolutions) not implemented.
            raise NotImplementedError("occlusion=True path not implemented")
        h, w = volume.shape[-2:]
        # The reference's scale = volume.max(); volume/scale; ...; scale*capt
        # round trip cancels exactly on this linear (occlusion=False) path, so
        # no global max, no divide pass and no post-irfft2 scale pass:
        #   captimg = irfft2(sum_d(rfft2(volume) * rfft2(psf)))
        fpsf = jnp.fft.rfft2(psf)                  # (1, C, D, H, Wf) complex64
        fvol = jnp.fft.rfft2(volume)               # (B, C, D, H, Wf) complex64
        # TODO(synk): fvol.real/.imag planar extraction (and the complex
        # recombination below) are extra HBM passes; an interleaved-complex
        # in-kernel multiply would remove them, but complex64 has no zero-copy
        # f32 view in XLA (BitcastConvert disallows complex), so planar is kept.
        out_re, out_im = freq_mul_sum_pallas(
            fvol.real, fvol.imag, fpsf[0].real, fpsf[0].imag)
        fcapt = jax.lax.complex(out_re, out_im)    # (B, C, H, Wf)
        captimg = jnp.fft.irfft2(fcapt, s=(h, w))
        return captimg, volume

    def _capture_from_rgbd_with_psf_impl(self, img, depthmap, psf, occlusion):
        # depthmap: (B, 1, H, W).  The `layered_depth` tensor is only needed on
        # the (unimplemented) occlusion path, so it is never built or written.
        volume = build_volume_pallas(img, depthmap[:, 0], self.n_depths)
        return self._capture_impl(volume, psf, occlusion)

    def forward(self, img, depthmap, occlusion=False):
        h, w = img.shape[-2:]
        psf = self.psf_at_camera(size=(h, w))[None]    # (1, n_wl, D, H, W)
        psf = self.normalize_psf(psf)
        captimg, volume = self._capture_from_rgbd_with_psf_impl(
            img, depthmap, psf, occlusion)
        return captimg, volume, psf


# -----------------------------------------------------------------------------
# Pure-JAX reference of the same forward pass (kept spec-faithful, including
# the scale round trip) for a correctness check.
# -----------------------------------------------------------------------------
def ref_forward(cam, img, depthmap):
    psf = cam.psf_at_camera(size=img.shape[-2:])[None]
    psf = psf / jnp.sum(psf, axis=(-2, -1), keepdims=True)
    dm = jnp.clip(depthmap, 1e-8, 1.0)[:, None]                     # (B,1,1,H,W)
    d = jnp.arange(cam.n_depths, dtype=jnp.float32).reshape(1, 1, -1, 1, 1) + 1.0
    diff = d - dm * cam.n_depths
    layered = jnp.where((diff >= 0.0) & (diff < 1.0), 1.0, 0.0)
    volume = layered * img[:, :, None]
    scale = jnp.max(volume)
    vol_n = volume / scale
    fpsf = jnp.fft.rfft2(psf)
    fvol = jnp.fft.rfft2(vol_n)
    fcapt = jnp.sum(fvol * fpsf, axis=2)
    capt = jnp.fft.irfft2(fcapt, s=img.shape[-2:])
    return scale * capt, scale * vol_n, psf


if __name__ == "__main__":
    key = jax.random.PRNGKey(0)
    k1, k2 = jax.random.split(key)

    B, C, H, W = 2, 3, 16, 16
    n_depths = 4

    img = jax.random.uniform(k1, (B, C, H, W), dtype=jnp.float32)
    depthmap = jax.random.uniform(k2, (B, 1, H, W), dtype=jnp.float32,
                                  minval=0.05, maxval=0.95)

    cam = PallasCamera(
        focal_depth=1.7, min_depth=1.0, max_depth=5.0, n_depths=n_depths,
        image_size=16, mask_size=16, focal_length=50e-3, mask_diameter=2.5e-3,
        camera_pixel_pitch=6.45e-6,
        wavelengths=[460e-9, 550e-9, 640e-9])

    captimg, volume, psf = cam.forward(img, depthmap, occlusion=False)
    jax.block_until_ready(captimg)
    jax.block_until_ready(volume)
    jax.block_until_ready(psf)

    # Correctness check against pure-JAX reference.
    capt_ref, vol_ref, psf_ref = ref_forward(cam, img, depthmap)
    assert captimg.shape == (B, C, H, W)
    assert volume.shape == (B, C, n_depths, H, W)
    assert psf.shape == (1, C, n_depths, H, W)
    assert jnp.allclose(psf, psf_ref, atol=1e-4, rtol=1e-4)
    assert jnp.allclose(volume, vol_ref, atol=1e-4, rtol=1e-4)
    assert jnp.allclose(captimg, capt_ref, atol=1e-4, rtol=1e-4)

    print("KERNEL_OK")
</pallas_src>

<mosaic_0001>
module attributes {stable_mosaic.version = 11 : i64} {
  func.func @_psf_normalize_kernel(%arg0: i32, %arg1: memref<12x16x16xf32, #tpu.memory_space<vmem>>, %arg2: memref<12x16x16xf32, #tpu.memory_space<vmem>>) attributes {dimension_semantics = [#tpu.dimension_semantics<parallel>], iteration_bounds = array<i64: 1>, scalar_prefetch = 0 : i64, scratch_operands = 0 : i64, tpu.core_type = #tpu.core_type<tc>, window_params = [{transform_indices = @transform_0, window_bounds = array<i64: 12, 16, 16>}, {transform_indices = @transform_1, window_bounds = array<i64: 12, 16, 16>}]} {
    %c0 = arith.constant 0 : index
    %c0_0 = arith.constant 0 : index
    %c0_1 = arith.constant 0 : index
    %0 = vector.load %arg1[%c0, %c0_0, %c0_1] : memref<12x16x16xf32, #tpu.memory_space<vmem>>, vector<12x16x16xf32>
    %cst = arith.constant dense<0.000000e+00> : vector<12x16xf32>
    %1 = vector.multi_reduction <add>, %0, %cst [2] : vector<12x16x16xf32> to vector<12x16xf32>
    %2 = vector.shape_cast %1 : vector<12x16xf32> to vector<12x16x1xf32>
    %cst_2 = arith.constant dense<0.000000e+00> : vector<12x1xf32>
    %3 = vector.multi_reduction <add>, %2, %cst_2 [1] : vector<12x16x1xf32> to vector<12x1xf32>
    %4 = vector.shape_cast %3 : vector<12x1xf32> to vector<12x1x1xf32>
    %5 = tpu.reciprocal %4 : vector<12x1x1xf32> -> vector<12x1x1xf32>
    %6 = vector.broadcast %5 : vector<12x1x1xf32> to vector<12x16x16xf32>
    %7 = arith.mulf %0, %6 : vector<12x16x16xf32>
    %c0_3 = arith.constant 0 : index
    %c0_4 = arith.constant 0 : index
    %c0_5 = arith.constant 0 : index
    %8 = vector.load %arg2[%c0_3, %c0_4, %c0_5] : memref<12x16x16xf32, #tpu.memory_space<vmem>>, vector<12x16x16xf32>
    tpu.vector_store %arg2[%c0_3, %c0_4, %c0_5], %7 {strides = array<i32>} : memref<12x16x16xf32, #tpu.memory_space<vmem>>, vector<12x16x16xf32>,
    return
  }
  func.func @transform_0(%arg0: i32) -> (i32, i32, i32) {
    %c0_i32 = arith.constant 0 : i32
    %c0_i32_0 = arith.constant 0 : i32
    %c0_i32_1 = arith.constant 0 : i32
    return %arg0, %c0_i32, %c0_i32_0 : i32, i32, i32
  }
  func.func @transform_1(%arg0: i32) -> (i32, i32, i32) {
    %c0_i32 = arith.constant 0 : i32
    %c0_i32_0 = arith.constant 0 : i32
    %c0_i32_1 = arith.constant 0 : i32
    return %arg0, %c0_i32, %c0_i32_0 : i32, i32, i32
  }
}

</mosaic_0001>

<llo_original>
// kernel: tpu_custom_call.1
$region0: #{tpu_custom_call.1}
  #allocation0 [shape = 'u32[]', space=smem, size = 0x4, offset = 0x4, fixed_abs, tag = 'smem constant byte address 0x4 - core index']
  #allocation1 [shape = 'u32[72,128]{1,0:T(1,128)}', space=vmem, size = 0x9000, scoped, tag = 'internal scratch']
  %s0 = inlined_call_operand.hbm [shape: f32[12,16,16], index: 0, kind: input, shape index: {}]
  %s1 = inlined_call_operand.hbm [shape: f32[12,16,16], index: 1, kind: output, shape index: {}]
  %s2 = sld [smem:[#allocation0]]
  $region18: #{tpu_custom_call.1} parent=0
    _
  %s4 = ssub.s32 1, %s2
  %s5 = scalar_select 0, %s4, %s2
  $region1: #{tpu_custom_call.1} parent=0
    #allocation2 [shape = 'u8[98304]{0}', space=vmem, size = 0x18000, scoped, tag = 'input window, operand 0, single buffered']
    #allocation3 [shape = 's32[1]{0}', space=sflag, size = 0x4, scoped, tag = 'scoped memory for tpu_custom_call.1']
    #allocation4 [shape = 's32[1]{0}', space=sflag, size = 0x4, scoped, tag = 'scoped memory for tpu_custom_call.1']
    #allocation5 [shape = 'u8[98304]{0}', space=vmem, size = 0x18000, scoped, tag = 'output window, operand 0, single buffered']
    %6 = vsyncpa [#allocation3], 0
    %7 = vsyncpa [#allocation4], 0
    // Predicated region
    $region2: #{tpu_custom_call.1} parent=1 // pred_check
      _
    $region3: #{tpu_custom_call.1} parent=1 // pred_check_branch
      %9 = sbr.rel (0) target = $region5
    $region4: #{tpu_custom_call.1} parent=1 // pred_region
      %11 = vsyncadd [#allocation3], 0
      %s12 = sshll.u32 %s0, 4
      %s13 = int_to_ptr.hbm [resolvable:$true] %s12
      %s14 = sshll.u32 [#allocation2], 4
      %s15 = int_to_ptr.vmem [resolvable:$true] %s14
      %20 = dma.hbm_to_vmem [thread:$0]  %s13, 3072, %s15, [#allocation3], 128, 128, 8
    $region5: #{tpu_custom_call.1} parent=1 // pred_fallthru
      _
    // Predicated region
    $region6: #{tpu_custom_call.1} parent=1 // pred_check
      _
    $region7: #{tpu_custom_call.1} parent=1 // pred_check_branch
      %22 = sbr.rel (0) target = $region9
    $region8: #{tpu_custom_call.1} parent=1 // pred_region
      %24 = dma.done [#allocation3], 3072
    $region9: #{tpu_custom_call.1} parent=1 // pred_fallthru
      _
    %v25 = vld [vmem:[#allocation2] sm:$0xff]
    %v26 = vld [vmem:[#allocation2 + $0x8] sm:$0xff]
    %v27 = vld [vmem:[#allocation2 + $0x10] sm:$0xff]
    %v28 = vld [vmem:[#allocation2 + $0x18] sm:$0xff]
    %v29 = vld [vmem:[#allocation2 + $0x20] sm:$0xff]
    %v30 = vld [vmem:[#allocation2 + $0x28] sm:$0xff]
    %v31 = vld [vmem:[#allocation2 + $0x30] sm:$0xff]
    %v32 = vld [vmem:[#allocation2 + $0x38] sm:$0xff]
    %v33 = vld [vmem:[#allocation2 + $0x40] sm:$0xff]
    %v34 = vld [vmem:[#allocation2 + $0x48] sm:$0xff]
    %v35 = vld [vmem:[#allocation2 + $0x50] sm:$0xff]
    %v36 = vld [vmem:[#allocation2 + $0x58] sm:$0xff]
    %v37 = vld [vmem:[#allocation2 + $0x60] sm:$0xff]
    %v38 = vld [vmem:[#allocation2 + $0x68] sm:$0xff]
    %v39 = vld [vmem:[#allocation2 + $0x70] sm:$0xff]
    %v40 = vld [vmem:[#allocation2 + $0x78] sm:$0xff]
    %v41 = vld [vmem:[#allocation2 + $0x80] sm:$0xff]
    %v42 = vld [vmem:[#allocation2 + $0x88] sm:$0xff]
    %v43 = vld [vmem:[#allocation2 + $0x90] sm:$0xff]
    %v44 = vld [vmem:[#allocation2 + $0x98] sm:$0xff]
    %v45 = vld [vmem:[#allocation2 + $0xa0] sm:$0xff]
    %v46 = vld [vmem:[#allocation2 + $0xa8] sm:$0xff]
    %v47 = vld [vmem:[#allocation2 + $0xb0] sm:$0xff]
    %v48 = vld [vmem:[#allocation2 + $0xb8] sm:$0xff]
    %vm49 = vcmask 130048
    %v50 = vsel %vm49, %v25, 0.0
    %51 = vadd.xlane.f32.xlu0 %v50
    %v52 = vpop.xlane.xlu0 %51
    %v53 = vsel %vm49, %v26, 0.0
    %54 = vadd.xlane.f32.xlu0 %v53
    %v55 = vpop.xlane.xlu0 %54
    %v56 = vsel %vm49, %v27, 0.0
    %57 = vadd.xlane.f32.xlu0 %v56
    %v58 = vpop.xlane.xlu0 %57
    %v59 = vsel %vm49, %v28, 0.0
    %60 = vadd.xlane.f32.xlu0 %v59
    %v61 = vpop.xlane.xlu0 %60
    %v62 = vsel %vm49, %v29, 0.0
    %63 = vadd.xlane.f32.xlu0 %v62
    %v64 = vpop.xlane.xlu0 %63
    %v65 = vsel %vm49, %v30, 0.0
    %66 = vadd.xlane.f32.xlu0 %v65
    %v67 = vpop.xlane.xlu0 %66
    %v68 = vsel %vm49, %v31, 0.0
    %69 = vadd.xlane.f32.xlu0 %v68
    %v70 = vpop.xlane.xlu0 %69
    %v71 = vsel %vm49, %v32, 0.0
    %72 = vadd.xlane.f32.xlu0 %v71
    %v73 = vpop.xlane.xlu0 %72
    %v74 = vsel %vm49, %v33, 0.0
    %75 = vadd.xlane.f32.xlu0 %v74
    %v76 = vpop.xlane.xlu0 %75
    %v77 = vsel %vm49, %v34, 0.0
    %78 = vadd.xlane.f32.xlu0 %v77
    %v79 = vpop.xlane.xlu0 %78
    %v80 = vsel %vm49, %v35, 0.0
    %81 = vadd.xlane.f32.xlu0 %v80
    %v82 = vpop.xlane.xlu0 %81
    %v83 = vsel %vm49, %v36, 0.0
    %84 = vadd.xlane.f32.xlu0 %v83
    %v85 = vpop.xlane.xlu0 %84
    %v86 = vsel %vm49, %v37, 0.0
    %87 = vadd.xlane.f32.xlu0 %v86
    %v88 = vpop.xlane.xlu0 %87
    %v89 = vsel %vm49, %v38, 0.0
    %90 = vadd.xlane.f32.xlu0 %v89
    %v91 = vpop.xlane.xlu0 %90
    %v92 = vsel %vm49, %v39, 0.0
    %93 = vadd.xlane.f32.xlu0 %v92
    %v94 = vpop.xlane.xlu0 %93
    %v95 = vsel %vm49, %v40, 0.0
    %96 = vadd.xlane.f32.xlu0 %v95
    %v97 = vpop.xlane.xlu0 %96
    %v98 = vsel %vm49, %v41, 0.0
    %99 = vadd.xlane.f32.xlu0 %v98
    %v100 = vpop.xlane.xlu0 %99
    %v101 = vsel %vm49, %v42, 0.0
    %102 = vadd.xlane.f32.xlu0 %v101
    %v103 = vpop.xlane.xlu0 %102
    %v104 = vsel %vm49, %v43, 0.0
    %105 = vadd.xlane.f32.xlu0 %v104
    %v106 = vpop.xlane.xlu0 %105
    %v107 = vsel %vm49, %v44, 0.0
    %108 = vadd.xlane.f32.xlu0 %v107
    %v109 = vpop.xlane.xlu0 %108
    %v110 = vsel %vm49, %v45, 0.0
    %111 = vadd.xlane.f32.xlu0 %v110
    %v112 = vpop.xlane.xlu0 %111
    %v113 = vsel %vm49, %v46, 0.0
    %114 = vadd.xlane.f32.xlu0 %v113
    %v115 = vpop.xlane.xlu0 %114
    %v116 = vsel %vm49, %v47, 0.0
    %117 = vadd.xlane.f32.xlu0 %v116
    %v118 = vpop.xlane.xlu0 %117
    %v119 = vsel %vm49, %v48, 0.0
    %120 = vadd.xlane.f32.xlu0 %v119
    %v121 = vpop.xlane.xlu0 %120
    %v122 = vadd.f32 %v52, %v55
    %v123 = vrot.slane %v122, 4
    %v124 = vadd.f32 %v122, %v123
    %v125 = vrot.slane %v124, 2
    %v126 = vadd.f32 %v124, %v125
    %v127 = vrot.slane %v126, 1
    %v128 = vadd.f32 %v126, %v127
    %v129 = vadd.f32 %v58, %v61
    %v130 = vrot.slane %v129, 4
    %v131 = vadd.f32 %v129, %v130
    %v132 = vrot.slane %v131, 2
    %v133 = vadd.f32 %v131, %v132
    %v134 = vrot.slane %v133, 1
    %v135 = vadd.f32 %v133, %v134
    %v136 = vadd.f32 %v64, %v67
    %v137 = vrot.slane %v136, 4
    %v138 = vadd.f32 %v136, %v137
    %v139 = vrot.slane %v138, 2
    %v140 = vadd.f32 %v138, %v139
    %v141 = vrot.slane %v140, 1
    %v142 = vadd.f32 %v140, %v141
    %v143 = vadd.f32 %v70, %v73
    %v144 = vrot.slane %v143, 4
    %v145 = vadd.f32 %v143, %v144
    %v146 = vrot.slane %v145, 2
    %v147 = vadd.f32 %v145, %v146
    %v148 = vrot.slane %v147, 1
    %v149 = vadd.f32 %v147, %v148
    %v150 = vadd.f32 %v76, %v79
    %v151 = vrot.slane %v150, 4
    %v152 = vadd.f32 %v150, %v151
    %v153 = vrot.slane %v152, 2
    %v154 = vadd.f32 %v152, %v153
    %v155 = vrot.slane %v154, 1
    %v156 = vadd.f32 %v154, %v155
    %v157 = vadd.f32 %v82, %v85
    %v158 = vrot.slane %v157, 4
    %v159 = vadd.f32 %v157, %v158
    %v160 = vrot.slane %v159, 2
    %v161 = vadd.f32 %v159, %v160
    %v162 = vrot.slane %v161, 1
    %v163 = vadd.f32 %v161, %v162
    %v164 = vadd.f32 %v88, %v91
    %v165 = vrot.slane %v164, 4
    %v166 = vadd.f32 %v164, %v165
    %v167 = vrot.slane %v166, 2
    %v168 = vadd.f32 %v166, %v167
    %v169 = vrot.slane %v168, 1
    %v170 = vadd.f32 %v168, %v169
    %v171 = vadd.f32 %v94, %v97
    %v172 = vrot.slane %v171, 4
    %v173 = vadd.f32 %v171, %v172
    %v174 = vrot.slane %v173, 2
    %v175 = vadd.f32 %v173, %v174
    %v176 = vrot.slane %v175, 1
    %v177 = vadd.f32 %v175, %v176
    %v178 = vadd.f32 %v100, %v103
    %v179 = vrot.slane %v178, 4
    %v180 = vadd.f32 %v178, %v179
    %v181 = vrot.slane %v180, 2
    %v182 = vadd.f32 %v180, %v181
    %v183 = vrot.slane %v182, 1
    %v184 = vadd.f32 %v182, %v183
    %v185 = vadd.f32 %v106, %v109
    %v186 = vrot.slane %v185, 4
    %v187 = vadd.f32 %v185, %v186
    %v188 = vrot.slane %v187, 2
    %v189 = vadd.f32 %v187, %v188
    %v190 = vrot.slane %v189, 1
    %v191 = vadd.f32 %v189, %v190
    %v192 = vadd.f32 %v112, %v115
    %v193 = vrot.slane %v192, 4
    %v194 = vadd.f32 %v192, %v193
    %v195 = vrot.slane %v194, 2
    %v196 = vadd.f32 %v194, %v195
    %v197 = vrot.slane %v196, 1
    %v198 = vadd.f32 %v196, %v197
    %v199 = vadd.f32 %v118, %v121
    %v200 = vrot.slane %v199, 4
    %v201 = vadd.f32 %v199, %v200
    %v202 = vrot.slane %v201, 2
    %v203 = vadd.f32 %v201, %v202
    %v204 = vrot.slane %v203, 1
    %v205 = vadd.f32 %v203, %v204
    %v206 = vrcp.pop %v128
    %v207 = vmul.f32 %v128, %v206
    %v208 = vsub.f32 1.0, %v207
    %v209 = vmul.f32 %v206, %v208
    %v210 = vadd.f32 %v206, %v209
    %vm211 = vweird.f32 %v128
    %vm212 = vweird.f32 %v206
    %vm213 = vmor %vm211, %vm212
    %v214 = vsel %vm213, %v206, %v210
    %v215 = vand.u32 2147483647, %v128
    %vm216 = vcmp.eq.f32.partialorder %v215, 8.507059e+37
    %v217 = vand.u32 %v128, 2147483648
    %v218 = vor.u32 1.1754944e-38, %v217
    %v219 = vsel %vm216, %v218, %v214
    %v220 = vrcp.pop %v135
    %v221 = vmul.f32 %v135, %v220
    %v222 = vsub.f32 1.0, %v221
    %v223 = vmul.f32 %v220, %v222
    %v224 = vadd.f32 %v220, %v223
    %vm225 = vweird.f32 %v135
    %vm226 = vweird.f32 %v220
    %vm227 = vmor %vm225, %vm226
    %v228 = vsel %vm227, %v220, %v224
    %v229 = vand.u32 2147483647, %v135
    %vm230 = vcmp.eq.f32.partialorder %v229, 8.507059e+37
    %v231 = vand.u32 %v135, 2147483648
    %v232 = vor.u32 1.1754944e-38, %v231
    %v233 = vsel %vm230, %v232, %v228
    %v234 = vrcp.pop %v142
    %v235 = vmul.f32 %v142, %v234
    %v236 = vsub.f32 1.0, %v235
    %v237 = vmul.f32 %v234, %v236
    %v238 = vadd.f32 %v234, %v237
    %vm239 = vweird.f32 %v142
    %vm240 = vweird.f32 %v234
    %vm241 = vmor %vm239, %vm240
    %v242 = vsel %vm241, %v234, %v238
    %v243 = vand.u32 2147483647, %v142
    %vm244 = vcmp.eq.f32.partialorder %v243, 8.507059e+37
    %v245 = vand.u32 %v142, 2147483648
    %v246 = vor.u32 1.1754944e-38, %v245
    %v247 = vsel %vm244, %v246, %v242
    %v248 = vrcp.pop %v149
    %v249 = vmul.f32 %v149, %v248
    %v250 = vsub.f32 1.0, %v249
    %v251 = vmul.f32 %v248, %v250
    %v252 = vadd.f32 %v248, %v251
    %vm253 = vweird.f32 %v149
    %vm254 = vweird.f32 %v248
    %vm255 = vmor %vm253, %vm254
    %v256 = vsel %vm255, %v248, %v252
    %v257 = vand.u32 2147483647, %v149
    %vm258 = vcmp.eq.f32.partialorder %v257, 8.507059e+37
    %v259 = vand.u32 %v149, 2147483648
    %v260 = vor.u32 1.1754944e-38, %v259
    %v261 = vsel %vm258, %v260, %v256
    %v262 = vrcp.pop %v156
    %v263 = vmul.f32 %v156, %v262
    %v264 = vsub.f32 1.0, %v263
    %v265 = vmul.f32 %v262, %v264
    %v266 = vadd.f32 %v262, %v265
    %vm267 = vweird.f32 %v156
    %vm268 = vweird.f32 %v262
    %vm269 = vmor %vm267, %vm268
    %v270 = vsel %vm269, %v262, %v266
    %v271 = vand.u32 2147483647, %v156
    %vm272 = vcmp.eq.f32.partialorder %v271, 8.507059e+37
    %v273 = vand.u32 %v156, 2147483648
    %v274 = vor.u32 1.1754944e-38, %v273
    %v275 = vsel %vm272, %v274, %v270
    %v276 = vrcp.pop %v163
    %v277 = vmul.f32 %v163, %v276
    %v278 = vsub.f32 1.0, %v277
    %v279 = vmul.f32 %v276, %v278
    %v280 = vadd.f32 %v276, %v279
    %vm281 = vweird.f32 %v163
    %vm282 = vweird.f32 %v276
    %vm283 = vmor %vm281, %vm282
    %v284 = vsel %vm283, %v276, %v280
    %v285 = vand.u32 2147483647, %v163
    %vm286 = vcmp.eq.f32.partialorder %v285, 8.507059e+37
    %v287 = vand.u32 %v163, 2147483648
    %v288 = vor.u32 1.1754944e-38, %v287
    %v289 = vsel %vm286, %v288, %v284
    %v290 = vrcp.pop %v170
    %v291 = vmul.f32 %v170, %v290
    %v292 = vsub.f32 1.0, %v291
    %v293 = vmul.f32 %v290, %v292
    %v294 = vadd.f32 %v290, %v293
    %vm295 = vweird.f32 %v170
    %vm296 = vweird.f32 %v290
    %vm297 = vmor %vm295, %vm296
    %v298 = vsel %vm297, %v290, %v294
    %v299 = vand.u32 2147483647, %v170
    %vm300 = vcmp.eq.f32.partialorder %v299, 8.507059e+37
    %v301 = vand.u32 %v170, 2147483648
    %v302 = vor.u32 1.1754944e-38, %v301
    %v303 = vsel %vm300, %v302, %v298
    %v304 = vrcp.pop %v177
    %v305 = vmul.f32 %v177, %v304
    %v306 = vsub.f32 1.0, %v305
    %v307 = vmul.f32 %v304, %v306
    %v308 = vadd.f32 %v304, %v307
    %vm309 = vweird.f32 %v177
    %vm310 = vweird.f32 %v304
    %vm311 = vmor %vm309, %vm310
    %v312 = vsel %vm311, %v304, %v308
    %v313 = vand.u32 2147483647, %v177
    %vm314 = vcmp.eq.f32.partialorder %v313, 8.507059e+37
    %v315 = vand.u32 %v177, 2147483648
    %v316 = vor.u32 1.1754944e-38, %v315
    %v317 = vsel %vm314, %v316, %v312
    %v318 = vrcp.pop %v184
    %v319 = vmul.f32 %v184, %v318
    %v320 = vsub.f32 1.0, %v319
    %v321 = vmul.f32 %v318, %v320
    %v322 = vadd.f32 %v318, %v321
    %vm323 = vweird.f32 %v184
    %vm324 = vweird.f32 %v318
    %vm325 = vmor %vm323, %vm324
    %v326 = vsel %vm325, %v318, %v322
    %v327 = vand.u32 2147483647, %v184
    %vm328 = vcmp.eq.f32.partialorder %v327, 8.507059e+37
    %v329 = vand.u32 %v184, 2147483648
    %v330 = vor.u32 1.1754944e-38, %v329
    %v331 = vsel %vm328, %v330, %v326
    %v332 = vrcp.pop %v191
    %v333 = vmul.f32 %v191, %v332
    %v334 = vsub.f32 1.0, %v333
    %v335 = vmul.f32 %v332, %v334
    %v336 = vadd.f32 %v332, %v335
    %vm337 = vweird.f32 %v191
    %vm338 = vweird.f32 %v332
    %vm339 = vmor %vm337, %vm338
    %v340 = vsel %vm339, %v332, %v336
    %v341 = vand.u32 2147483647, %v191
    %vm342 = vcmp.eq.f32.partialorder %v341, 8.507059e+37
    %v343 = vand.u32 %v191, 2147483648
    %v344 = vor.u32 1.1754944e-38, %v343
    %v345 = vsel %vm342, %v344, %v340
    %v346 = vrcp.pop %v198
    %v347 = vmul.f32 %v198, %v346
    %v348 = vsub.f32 1.0, %v347
    %v349 = vmul.f32 %v346, %v348
    %v350 = vadd.f32 %v346, %v349
    %vm351 = vweird.f32 %v198
    %vm352 = vweird.f32 %v346
    %vm353 = vmor %vm351, %vm352
    %v354 = vsel %vm353, %v346, %v350
    %v355 = vand.u32 2147483647, %v198
    %vm356 = vcmp.eq.f32.partialorder %v355, 8.507059e+37
    %v357 = vand.u32 %v198, 2147483648
    %v358 = vor.u32 1.1754944e-38, %v357
    %v359 = vsel %vm356, %v358, %v354
    %v360 = vrcp.pop %v205
    %v361 = vmul.f32 %v205, %v360
    %v362 = vsub.f32 1.0, %v361
    %v363 = vmul.f32 %v360, %v362
    %v364 = vadd.f32 %v360, %v363
    %vm365 = vweird.f32 %v205
    %vm366 = vweird.f32 %v360
    %vm367 = vmor %vm365, %vm366
    %v368 = vsel %vm367, %v360, %v364
    %v369 = vand.u32 2147483647, %v205
    %vm370 = vcmp.eq.f32.partialorder %v369, 8.507059e+37
    %v371 = vand.u32 %v205, 2147483648
    %v372 = vor.u32 1.1754944e-38, %v371
    %v373 = vsel %vm370, %v372, %v368
    %v374 = vmul.f32 %v25, %v219
    %v375 = vmul.f32 %v26, %v219
    %v376 = vmul.f32 %v27, %v233
    %v377 = vmul.f32 %v28, %v233
    %v378 = vmul.f32 %v29, %v247
    %v379 = vmul.f32 %v30, %v247
    %v380 = vmul.f32 %v31, %v261
    %v381 = vmul.f32 %v32, %v261
    %v382 = vmul.f32 %v33, %v275
    %v383 = vmul.f32 %v34, %v275
    %v384 = vmul.f32 %v35, %v289
    %v385 = vmul.f32 %v36, %v289
    %v386 = vmul.f32 %v37, %v303
    %v387 = vmul.f32 %v38, %v303
    %v388 = vmul.f32 %v39, %v317
    %v389 = vmul.f32 %v40, %v317
    %v390 = vmul.f32 %v41, %v331
    %v391 = vmul.f32 %v42, %v331
    %v392 = vmul.f32 %v43, %v345
    %v393 = vmul.f32 %v44, %v345
    %v394 = vmul.f32 %v45, %v359
    %v395 = vmul.f32 %v46, %v359
    %v396 = vmul.f32 %v47, %v373
    %v397 = vmul.f32 %v48, %v373
    %398 = vst.msk [vmem:[#allocation5] sm:$0xff] %vm49, %v374
    %399 = vst.msk [vmem:[#allocation5 + $0x8] sm:$0xff] %vm49, %v375
    %400 = vst.msk [vmem:[#allocation5 + $0x10] sm:$0xff] %vm49, %v376
    %401 = vst.msk [vmem:[#allocation5 + $0x18] sm:$0xff] %vm49, %v377
    %402 = vst.msk [vmem:[#allocation5 + $0x20] sm:$0xff] %vm49, %v378
    %403 = vst.msk [vmem:[#allocation5 + $0x28] sm:$0xff] %vm49, %v379
    %404 = vst.msk [vmem:[#allocation5 + $0x30] sm:$0xff] %vm49, %v380
    %405 = vst.msk [vmem:[#allocation5 + $0x38] sm:$0xff] %vm49, %v381
    %406 = vst.msk [vmem:[#allocation5 + $0x40] sm:$0xff] %vm49, %v382
    %407 = vst.msk [vmem:[#allocation5 + $0x48] sm:$0xff] %vm49, %v383
    %408 = vst.msk [vmem:[#allocation5 + $0x50] sm:$0xff] %vm49, %v384
    %409 = vst.msk [vmem:[#allocation5 + $0x58] sm:$0xff] %vm49, %v385
    %410 = vst.msk [vmem:[#allocation5 + $0x60] sm:$0xff] %vm49, %v386
    %411 = vst.msk [vmem:[#allocation5 + $0x68] sm:$0xff] %vm49, %v387
    %412 = vst.msk [vmem:[#allocation5 + $0x70] sm:$0xff] %vm49, %v388
    %413 = vst.msk [vmem:[#allocation5 + $0x78] sm:$0xff] %vm49, %v389
    %414 = vst.msk [vmem:[#allocation5 + $0x80] sm:$0xff] %vm49, %v390
    %415 = vst.msk [vmem:[#allocation5 + $0x88] sm:$0xff] %vm49, %v391
    %416 = vst.msk [vmem:[#allocation5 + $0x90] sm:$0xff] %vm49, %v392
    %417 = vst.msk [vmem:[#allocation5 + $0x98] sm:$0xff] %vm49, %v393
    %418 = vst.msk [vmem:[#allocation5 + $0xa0] sm:$0xff] %vm49, %v394
    %419 = vst.msk [vmem:[#allocation5 + $0xa8] sm:$0xff] %vm49, %v395
    %420 = vst.msk [vmem:[#allocation5 + $0xb0] sm:$0xff] %vm49, %v396
    %421 = vst.msk [vmem:[#allocation5 + $0xb8] sm:$0xff] %vm49, %v397
    // Predicated region
    $region10: #{tpu_custom_call.1} parent=1 // pred_check
      _
    $region11: #{tpu_custom_call.1} parent=1 // pred_check_branch
      %423 = sbr.rel (0) target = $region13
    $region12: #{tpu_custom_call.1} parent=1 // pred_region
      %425 = vsyncadd [#allocation4], 0
      %s426 = sshll.u32 [#allocation5], 4
      %s427 = int_to_ptr.vmem [resolvable:$true] %s426
      %s428 = sshll.u32 %s1, 4
      %s429 = int_to_ptr.hbm [resolvable:$true] %s428
      %434 = dma.vmem_to_hbm [thread:$0]  %s427, 3072, %s429, [#allocation4], 128, 128, 8
    $region13: #{tpu_custom_call.1} parent=1 // pred_fallthru
      _
    // Predicated region
    $region14: #{tpu_custom_call.1} parent=1 // pred_check
      _
    $region15: #{tpu_custom_call.1} parent=1 // pred_check_branch
      %436 = sbr.rel (0) target = $region17
    $region16: #{tpu_custom_call.1} parent=1 // pred_region
      %438 = dma.done [#allocation4], 3072
    $region17: #{tpu_custom_call.1} parent=1 // pred_fallthru
      _
    %439 = vsyncpa [#allocation3], 1
    %440 = vsyncpa [#allocation4], 1

</llo_original>
